<compile_context>
chip_gen: v5e
topology: v5e:2x2
jax: 0.10.0
libtpu: 0.0.40
codegen_flags: <defaults>
</compile_context>

<pallas_src>
import functools

import jax
import jax.numpy as jnp
from jax.experimental import pallas as pl
from jax.experimental.pallas import tpu as pltpu


# ------------------------- fused 3x3 conv kernel --------------------------------

def _conv3x3_kernel(*refs, n_in, mv, wp, relu):
    # refs = x_refs[n_in] (1, Mp, Ci) bf16, w_refs[n_in] (9, Ci, TCO) bf16,
    #        b_ref (1, TCO) f32, o_ref (1, Mv, TCO) bf16
    x_refs = refs[:n_in]
    w_refs = refs[n_in:2 * n_in]
    b_ref = refs[2 * n_in]
    o_ref = refs[2 * n_in + 1]
    tco = o_ref.shape[-1]

    acc = jnp.zeros((mv, tco), jnp.float32)
    for i in range(n_in):
        xall = x_refs[i][0]                       # whole padded, flattened image (Mp, Ci)
        for dy in range(3):
            for dx in range(3):
                shift = dy * wp + dx              # static row shift in flat padded coords
                xt = xall[shift:shift + mv, :]    # (Mv, Ci) shifted view
                wt = w_refs[i][dy * 3 + dx]       # (Ci, TCO)
                acc = acc + jnp.dot(xt, wt, preferred_element_type=jnp.float32)
    acc = acc + b_ref[...]                        # f32 bias
    if relu:
        acc = jnp.maximum(acc, 0.0)               # fused ReLU (free VPU work)
    o_ref[0] = acc.astype(o_ref.dtype)


def conv3x3(xs, ws, b, *, relu):
    """3x3 conv, stride 1, pad 1, fused bias (+ optional ReLU).

    xs: NHWC array or list of NHWC arrays (un-concatenated channel chunks).
    ws: matching list of weight chunks, each (9, Ci, Cout) bf16 (tap order dy*3+dx).
    b : (Cout,) f32 bias.
    """
    if not isinstance(xs, (list, tuple)):
        xs = [xs]
    assert len(xs) == len(ws)
    N, H, W, _ = xs[0].shape
    Cout = ws[0].shape[-1]
    Wp = W + 2                 # padded width
    Mp = (H + 3) * Wp          # padded+flattened rows (1 top pad row, 2 bottom pad rows)
    Mv = H * Wp                # "virtual" output rows; the 2 wrap columns get discarded

    xf = []
    for x, w in zip(xs, ws):
        assert x.shape[:3] == (N, H, W) and x.shape[3] == w.shape[1]
        xp = jnp.pad(x.astype(jnp.bfloat16), ((0, 0), (1, 2), (1, 1), (0, 0)))
        xf.append(xp.reshape(N, Mp, x.shape[3]))
    b2 = b.reshape(1, Cout).astype(jnp.float32)

    if Cout % 256 == 0:
        tco = 256              # fill the 256-wide MXU N dim on v6e/v7x
    elif Cout % 128 == 0:
        tco = 128
    else:
        tco = Cout             # e.g. final Cout=3
    assert Cout % tco == 0

    kern = functools.partial(_conv3x3_kernel, n_in=len(xf), mv=Mv, wp=Wp, relu=relu)

    in_specs = [pl.BlockSpec((1, Mp, x.shape[-1]), lambda n, c: (n, 0, 0)) for x in xf]
    in_specs += [pl.BlockSpec((9, w.shape[1], tco), lambda n, c: (0, 0, c)) for w in ws]
    in_specs.append(pl.BlockSpec((1, tco), lambda n, c: (0, c)))

    out = pl.pallas_call(
        kern,
        out_shape=jax.ShapeDtypeStruct((N, Mv, Cout), jnp.bfloat16),
        grid_spec=pltpu.PrefetchScalarGridSpec(
            num_scalar_prefetch=0,
            grid=(N, Cout // tco),
            in_specs=in_specs,
            out_specs=pl.BlockSpec((1, Mv, tco), lambda n, c: (n, 0, c)),
        ),
        compiler_params=pltpu.CompilerParams(
            dimension_semantics=("parallel", "parallel"),
            vmem_limit_bytes=48 * 1024 * 1024,   # fits v7x 64 MiB with headroom
        ),
    )(*xf, *ws, b2)

    # Drop the 2 wrap-around columns per row and recover NHWC.
    return out.reshape(N, H, Wp, Cout)[:, :, :W, :]


# ----------------------------- JAX glue ops --------------------------------------

def maxpool2x2(x):
    N, H, W, C = x.shape
    return x.reshape(N, H // 2, 2, W // 2, 2, C).max(axis=(2, 4))


def upsample_bilinear_x2_align_corners(x):
    # TODO(synk): resampling kept as plain-JAX glue (gather-heavy, no clean Pallas tile).
    def interp(arr, axis):
        in_size = arr.shape[axis]
        out_size = 2 * in_size
        if in_size == 1:
            return jnp.repeat(arr, out_size, axis=axis)
        pos = jnp.arange(out_size, dtype=jnp.float32) * (in_size - 1) / (out_size - 1)
        i0 = jnp.clip(jnp.floor(pos).astype(jnp.int32), 0, in_size - 2)
        frac = pos - i0.astype(jnp.float32)
        a = jnp.take(arr, i0, axis=axis)
        bb = jnp.take(arr, i0 + 1, axis=axis)
        shp = [1] * arr.ndim
        shp[axis] = out_size
        frac = frac.reshape(shp)
        return a * (1.0 - frac) + bb * frac

    x = interp(x, 1)
    x = interp(x, 2)
    return x


# ----------------------------- parameters ----------------------------------------

ENC_CONVS = [(3, 64), (64, 64),
             (64, 128), (128, 128),
             (128, 256), (256, 256), (256, 256), (256, 256),
             (256, 512), (512, 512), (512, 512), (512, 512),
             (512, 512), (512, 512), (512, 512), (512, 512)]
ENC_POOL_AFTER = (1, 3, 7, 11, 15)

# cins are listed as chunks so concat inputs stay un-materialized (split-K in kernel).
DECODER_CFG = {
    'uplayer0': [([512], 1024), ([1024], 512)],
    'uplayer1': [([512, 512], 512), ([512], 512), ([512], 512), ([512], 512),
                 ([512], 512), ([512], 512), ([512], 512), ([512], 256)],
    'uplayer2': [([256, 256], 256), ([256], 256), ([256], 256), ([256], 128)],
    'uplayer3': [([128, 128], 128), ([128], 64)],
    'uplayer4': [([64, 64], 64), ([64], 3)],
}


def init_conv(key, cins, cout):
    keys = jax.random.split(key, len(cins) + 1)
    std = (2.0 / (9.0 * sum(cins))) ** 0.5
    ws = [(jax.random.normal(k, (9, ci, cout), jnp.float32) * std).astype(jnp.bfloat16)
          for k, ci in zip(keys[:-1], cins)]
    b = jax.random.normal(keys[-1], (cout,), jnp.float32) * 0.01
    return ws, b


def init_params(key):
    params = {'encoder': [], 'decoder': {}}
    for cin, cout in ENC_CONVS:
        key, sub = jax.random.split(key)
        params['encoder'].append(init_conv(sub, [cin], cout))
    for name, convs in DECODER_CFG.items():
        lst = []
        for cins, cout in convs:
            key, sub = jax.random.split(key)
            lst.append(init_conv(sub, cins, cout))
        params['decoder'][name] = lst
    return params


# ----------------------------- model forward -------------------------------------

def encoder_forward(enc_params, x):
    """VGG19 `features`. Only the taps the decoder consumes are kept:
       f4  = module 3  output (ReLU),   64 ch
       f9  = module 8  output (ReLU),  128 ch
       f17 = module 16 output (Conv, PRE-ReLU), 256 ch
       f36 = module 35 output (ReLU),  512 ch
       bottom = module 36 output (MaxPool), 512 ch
    """
    skips = {}
    h = x
    for i, (ws, b) in enumerate(enc_params):
        if i == 7:
            pre = conv3x3(h, ws, b, relu=False)   # features[17] is the pre-ReLU conv out
            skips['f17'] = pre
            h = jnp.maximum(pre, 0.0)
        else:
            h = conv3x3(h, ws, b, relu=True)      # ReLU fused in-kernel
            if i == 1:
                skips['f4'] = h
            elif i == 3:
                skips['f9'] = h
            elif i == 15:
                skips['f36'] = h
        if i in ENC_POOL_AFTER:
            h = maxpool2x2(h)
    skips['bottom'] = h
    return skips


def decoder_forward(dec_params, skips):
    p0 = dec_params['uplayer0']
    x = conv3x3(skips['bottom'], *p0[0], relu=False)
    x = conv3x3(x, *p0[1], relu=False)
    x = upsample_bilinear_x2_align_corners(x)
    x1 = jnp.maximum(x, 0.0)

    p1 = dec_params['uplayer1']
    x = conv3x3([x1, skips['f36']], *p1[0], relu=True)   # concat fused as split-K
    x = conv3x3(x, *p1[1], relu=True)
    x = conv3x3(x, *p1[2], relu=True)
    x = upsample_bilinear_x2_align_corners(x)
    x = conv3x3(x, *p1[3], relu=True)
    x = conv3x3(x, *p1[4], relu=True)
    x = conv3x3(x, *p1[5], relu=True)
    x = conv3x3(x, *p1[6], relu=True)
    x = upsample_bilinear_x2_align_corners(x)
    x2 = conv3x3(x, *p1[7], relu=True)

    p2 = dec_params['uplayer2']
    x = conv3x3([x2, skips['f17']], *p2[0], relu=True)
    x = conv3x3(x, *p2[1], relu=True)
    x = conv3x3(x, *p2[2], relu=True)
    x = upsample_bilinear_x2_align_corners(x)
    x3 = conv3x3(x, *p2[3], relu=True)

    p3 = dec_params['uplayer3']
    x = conv3x3([x3, skips['f9']], *p3[0], relu=True)
    x = upsample_bilinear_x2_align_corners(x)
    x4 = conv3x3(x, *p3[1], relu=True)

    p4 = dec_params['uplayer4']
    x = conv3x3([x4, skips['f4']], *p4[0], relu=True)
    x5 = conv3x3(x, *p4[1], relu=False)
    return x5


def network_forward(params, x_nchw):
    N, C, H, W = x_nchw.shape
    assert C == 3 and H % 32 == 0 and W % 32 == 0, (N, C, H, W)
    x = jnp.transpose(x_nchw, (0, 2, 3, 1))        # NCHW -> NHWC
    skips = encoder_forward(params['encoder'], x)
    out = decoder_forward(params['decoder'], skips)
    return jnp.transpose(out, (0, 3, 1, 2)).astype(jnp.float32)   # NHWC -> NCHW


# --------------------------------- main -------------------------------------------

def _conv3x3_reference(x, w9, b):
    w = w9.astype(jnp.float32).reshape(3, 3, w9.shape[1], w9.shape[2])
    y = jax.lax.conv_general_dilated(
        x.astype(jnp.float32), w, window_strides=(1, 1), padding='SAME',
        dimension_numbers=('NHWC', 'HWIO', 'NHWC'))
    return y + b.reshape(1, 1, 1, -1)


if __name__ == "__main__":
    key = jax.random.PRNGKey(0)
    pkey, xkey, tkey = jax.random.split(key, 3)

    # Small self-check of the fused tap-accumulating conv kernel vs lax.conv.
    tk1, tk2, tk3 = jax.random.split(tkey, 3)
    xt = jax.random.normal(tk1, (1, 8, 8, 5), jnp.float32).astype(jnp.bfloat16)
    wt = (jax.random.normal(tk2, (9, 5, 7), jnp.float32) * 0.2).astype(jnp.bfloat16)
    bt = jax.random.normal(tk3, (7,), jnp.float32) * 0.1
    got = jax.jit(lambda a, w, b: conv3x3(a, [w], b, relu=False))(xt, wt, bt)
    want = _conv3x3_reference(xt, wt, bt)
    err = float(jnp.max(jnp.abs(got.astype(jnp.float32) - want)))
    assert err < 5e-2, f"conv3x3 mismatch vs reference: {err}"

    params = init_params(pkey)
    # Spatial must be a multiple of 32 (five VGG maxpools); smallest sensible demo: 64x64.
    x = jax.random.normal(xkey, (1, 3, 64, 64), jnp.float32)

    fwd = jax.jit(network_forward)
    out = jax.block_until_ready(fwd(params, x))

    assert out.shape == (1, 3, 64, 64), out.shape
    assert bool(jnp.all(jnp.isfinite(out)))
    print("KERNEL_OK")
</pallas_src>

<mosaic_0001>
module attributes {stable_mosaic.version = 11 : i64} {
  func.func @_conv3x3_kernel(%arg0: i32, %arg1: i32, %arg2: memref<1x110x5xbf16, #tpu.memory_space<vmem>>, %arg3: memref<9x5x7xbf16, #tpu.memory_space<vmem>>, %arg4: memref<1x7xf32, #tpu.memory_space<vmem>>, %arg5: memref<1x80x7xbf16, #tpu.memory_space<vmem>>) attributes {dimension_semantics = [#tpu.dimension_semantics<parallel>, #tpu.dimension_semantics<parallel>], iteration_bounds = array<i64: 1, 1>, scalar_prefetch = 0 : i64, scratch_operands = 0 : i64, tpu.core_type = #tpu.core_type<tc>, window_params = [{transform_indices = @transform_0, window_bounds = array<i64: 1, 110, 5>}, {transform_indices = @transform_1, window_bounds = array<i64: 9, 5, 7>}, {transform_indices = @transform_2, window_bounds = array<i64: 1, 7>}, {transform_indices = @transform_3, window_bounds = array<i64: 1, 80, 7>}]} {
    %cst = arith.constant 0.000000e+00 : f32
    %0 = vector.broadcast %cst : f32 to vector<80x7xf32>
    %c0 = arith.constant 0 : index
    %c0_0 = arith.constant 0 : index
    %c0_1 = arith.constant 0 : index
    %1 = vector.load %arg2[%c0, %c0_0, %c0_1] : memref<1x110x5xbf16, #tpu.memory_space<vmem>>, vector<1x110x5xbf16>
    %2 = vector.shape_cast %1 : vector<1x110x5xbf16> to vector<110x5xbf16>
    %3 = vector.extract_strided_slice %2 {offsets = [0, 0], sizes = [80, 5], strides = [1, 1]} : vector<110x5xbf16> to vector<80x5xbf16>
    %c0_2 = arith.constant 0 : index
    %c0_3 = arith.constant 0 : index
    %c0_4 = arith.constant 0 : index
    %4 = vector.load %arg3[%c0_2, %c0_3, %c0_4] : memref<9x5x7xbf16, #tpu.memory_space<vmem>>, vector<1x5x7xbf16>
    %5 = vector.shape_cast %4 : vector<1x5x7xbf16> to vector<5x7xbf16>
    %cst_5 = arith.constant dense<0.000000e+00> : vector<80x7xf32>
    %6 = tpu.matmul %3, %5, %cst_5 {dimension_numbers = #tpu.dot_dimension_numbers<[1], [0], [0], [1], [0, 0, 1, 1], [], []>} : vector<80x5xbf16>, vector<5x7xbf16>, vector<80x7xf32> -> vector<80x7xf32>
    %7 = arith.addf %0, %6 : vector<80x7xf32>
    %8 = vector.extract_strided_slice %2 {offsets = [1, 0], sizes = [80, 5], strides = [1, 1]} : vector<110x5xbf16> to vector<80x5xbf16>
    %c1 = arith.constant 1 : index
    %c0_6 = arith.constant 0 : index
    %c0_7 = arith.constant 0 : index
    %9 = vector.load %arg3[%c1, %c0_6, %c0_7] : memref<9x5x7xbf16, #tpu.memory_space<vmem>>, vector<1x5x7xbf16>
    %10 = vector.shape_cast %9 : vector<1x5x7xbf16> to vector<5x7xbf16>
    %cst_8 = arith.constant dense<0.000000e+00> : vector<80x7xf32>
    %11 = tpu.matmul %8, %10, %cst_8 {dimension_numbers = #tpu.dot_dimension_numbers<[1], [0], [0], [1], [0, 0, 1, 1], [], []>} : vector<80x5xbf16>, vector<5x7xbf16>, vector<80x7xf32> -> vector<80x7xf32>
    %12 = arith.addf %7, %11 : vector<80x7xf32>
    %13 = vector.extract_strided_slice %2 {offsets = [2, 0], sizes = [80, 5], strides = [1, 1]} : vector<110x5xbf16> to vector<80x5xbf16>
    %c2 = arith.constant 2 : index
    %c0_9 = arith.constant 0 : index
    %c0_10 = arith.constant 0 : index
    %14 = vector.load %arg3[%c2, %c0_9, %c0_10] : memref<9x5x7xbf16, #tpu.memory_space<vmem>>, vector<1x5x7xbf16>
    %15 = vector.shape_cast %14 : vector<1x5x7xbf16> to vector<5x7xbf16>
    %cst_11 = arith.constant dense<0.000000e+00> : vector<80x7xf32>
    %16 = tpu.matmul %13, %15, %cst_11 {dimension_numbers = #tpu.dot_dimension_numbers<[1], [0], [0], [1], [0, 0, 1, 1], [], []>} : vector<80x5xbf16>, vector<5x7xbf16>, vector<80x7xf32> -> vector<80x7xf32>
    %17 = arith.addf %12, %16 : vector<80x7xf32>
    %18 = vector.extract_strided_slice %2 {offsets = [10, 0], sizes = [80, 5], strides = [1, 1]} : vector<110x5xbf16> to vector<80x5xbf16>
    %c3 = arith.constant 3 : index
    %c0_12 = arith.constant 0 : index
    %c0_13 = arith.constant 0 : index
    %19 = vector.load %arg3[%c3, %c0_12, %c0_13] : memref<9x5x7xbf16, #tpu.memory_space<vmem>>, vector<1x5x7xbf16>
    %20 = vector.shape_cast %19 : vector<1x5x7xbf16> to vector<5x7xbf16>
    %cst_14 = arith.constant dense<0.000000e+00> : vector<80x7xf32>
    %21 = tpu.matmul %18, %20, %cst_14 {dimension_numbers = #tpu.dot_dimension_numbers<[1], [0], [0], [1], [0, 0, 1, 1], [], []>} : vector<80x5xbf16>, vector<5x7xbf16>, vector<80x7xf32> -> vector<80x7xf32>
    %22 = arith.addf %17, %21 : vector<80x7xf32>
    %23 = vector.extract_strided_slice %2 {offsets = [11, 0], sizes = [80, 5], strides = [1, 1]} : vector<110x5xbf16> to vector<80x5xbf16>
    %c4 = arith.constant 4 : index
    %c0_15 = arith.constant 0 : index
    %c0_16 = arith.constant 0 : index
    %24 = vector.load %arg3[%c4, %c0_15, %c0_16] : memref<9x5x7xbf16, #tpu.memory_space<vmem>>, vector<1x5x7xbf16>
    %25 = vector.shape_cast %24 : vector<1x5x7xbf16> to vector<5x7xbf16>
    %cst_17 = arith.constant dense<0.000000e+00> : vector<80x7xf32>
    %26 = tpu.matmul %23, %25, %cst_17 {dimension_numbers = #tpu.dot_dimension_numbers<[1], [0], [0], [1], [0, 0, 1, 1], [], []>} : vector<80x5xbf16>, vector<5x7xbf16>, vector<80x7xf32> -> vector<80x7xf32>
    %27 = arith.addf %22, %26 : vector<80x7xf32>
    %28 = vector.extract_strided_slice %2 {offsets = [12, 0], sizes = [80, 5], strides = [1, 1]} : vector<110x5xbf16> to vector<80x5xbf16>
    %c5 = arith.constant 5 : index
    %c0_18 = arith.constant 0 : index
    %c0_19 = arith.constant 0 : index
    %29 = vector.load %arg3[%c5, %c0_18, %c0_19] : memref<9x5x7xbf16, #tpu.memory_space<vmem>>, vector<1x5x7xbf16>
    %30 = vector.shape_cast %29 : vector<1x5x7xbf16> to vector<5x7xbf16>
    %cst_20 = arith.constant dense<0.000000e+00> : vector<80x7xf32>
    %31 = tpu.matmul %28, %30, %cst_20 {dimension_numbers = #tpu.dot_dimension_numbers<[1], [0], [0], [1], [0, 0, 1, 1], [], []>} : vector<80x5xbf16>, vector<5x7xbf16>, vector<80x7xf32> -> vector<80x7xf32>
    %32 = arith.addf %27, %31 : vector<80x7xf32>
    %33 = vector.extract_strided_slice %2 {offsets = [20, 0], sizes = [80, 5], strides = [1, 1]} : vector<110x5xbf16> to vector<80x5xbf16>
    %c6 = arith.constant 6 : index
    %c0_21 = arith.constant 0 : index
    %c0_22 = arith.constant 0 : index
    %34 = vector.load %arg3[%c6, %c0_21, %c0_22] : memref<9x5x7xbf16, #tpu.memory_space<vmem>>, vector<1x5x7xbf16>
    %35 = vector.shape_cast %34 : vector<1x5x7xbf16> to vector<5x7xbf16>
    %cst_23 = arith.constant dense<0.000000e+00> : vector<80x7xf32>
    %36 = tpu.matmul %33, %35, %cst_23 {dimension_numbers = #tpu.dot_dimension_numbers<[1], [0], [0], [1], [0, 0, 1, 1], [], []>} : vector<80x5xbf16>, vector<5x7xbf16>, vector<80x7xf32> -> vector<80x7xf32>
    %37 = arith.addf %32, %36 : vector<80x7xf32>
    %38 = vector.extract_strided_slice %2 {offsets = [21, 0], sizes = [80, 5], strides = [1, 1]} : vector<110x5xbf16> to vector<80x5xbf16>
    %c7 = arith.constant 7 : index
    %c0_24 = arith.constant 0 : index
    %c0_25 = arith.constant 0 : index
    %39 = vector.load %arg3[%c7, %c0_24, %c0_25] : memref<9x5x7xbf16, #tpu.memory_space<vmem>>, vector<1x5x7xbf16>
    %40 = vector.shape_cast %39 : vector<1x5x7xbf16> to vector<5x7xbf16>
    %cst_26 = arith.constant dense<0.000000e+00> : vector<80x7xf32>
    %41 = tpu.matmul %38, %40, %cst_26 {dimension_numbers = #tpu.dot_dimension_numbers<[1], [0], [0], [1], [0, 0, 1, 1], [], []>} : vector<80x5xbf16>, vector<5x7xbf16>, vector<80x7xf32> -> vector<80x7xf32>
    %42 = arith.addf %37, %41 : vector<80x7xf32>
    %43 = vector.extract_strided_slice %2 {offsets = [22, 0], sizes = [80, 5], strides = [1, 1]} : vector<110x5xbf16> to vector<80x5xbf16>
    %c8 = arith.constant 8 : index
    %c0_27 = arith.constant 0 : index
    %c0_28 = arith.constant 0 : index
    %44 = vector.load %arg3[%c8, %c0_27, %c0_28] : memref<9x5x7xbf16, #tpu.memory_space<vmem>>, vector<1x5x7xbf16>
    %45 = vector.shape_cast %44 : vector<1x5x7xbf16> to vector<5x7xbf16>
    %cst_29 = arith.constant dense<0.000000e+00> : vector<80x7xf32>
    %46 = tpu.matmul %43, %45, %cst_29 {dimension_numbers = #tpu.dot_dimension_numbers<[1], [0], [0], [1], [0, 0, 1, 1], [], []>} : vector<80x5xbf16>, vector<5x7xbf16>, vector<80x7xf32> -> vector<80x7xf32>
    %47 = arith.addf %42, %46 : vector<80x7xf32>
    %c0_30 = arith.constant 0 : index
    %c0_31 = arith.constant 0 : index
    %48 = vector.load %arg4[%c0_30, %c0_31] : memref<1x7xf32, #tpu.memory_space<vmem>>, vector<1x7xf32>
    %49 = vector.broadcast %48 : vector<1x7xf32> to vector<80x7xf32>
    %50 = arith.addf %47, %49 : vector<80x7xf32>
    %51 = arith.truncf %50 : vector<80x7xf32> to vector<80x7xbf16>
    %c0_32 = arith.constant 0 : index
    %c0_33 = arith.constant 0 : index
    %c0_34 = arith.constant 0 : index
    %52 = vector.load %arg5[%c0_32, %c0_33, %c0_34] : memref<1x80x7xbf16, #tpu.memory_space<vmem>>, vector<1x80x7xbf16>
    %53 = vector.shape_cast %52 : vector<1x80x7xbf16> to vector<80x7xbf16>
    %54 = vector.shape_cast %51 : vector<80x7xbf16> to vector<1x80x7xbf16>
    tpu.vector_store %arg5[%c0_32, %c0_33, %c0_34], %54 {strides = array<i32>} : memref<1x80x7xbf16, #tpu.memory_space<vmem>>, vector<1x80x7xbf16>,
    return
  }
  func.func @transform_0(%arg0: i32, %arg1: i32) -> (i32, i32, i32) {
    %c0_i32 = arith.constant 0 : i32
    %c0_i32_0 = arith.constant 0 : i32
    %c0_i32_1 = arith.constant 0 : i32
    return %arg0, %c0_i32, %c0_i32_0 : i32, i32, i32
  }
  func.func @transform_1(%arg0: i32, %arg1: i32) -> (i32, i32, i32) {
    %c0_i32 = arith.constant 0 : i32
    %c0_i32_0 = arith.constant 0 : i32
    %c0_i32_1 = arith.constant 0 : i32
    return %c0_i32, %c0_i32_0, %arg1 : i32, i32, i32
  }
  func.func @transform_2(%arg0: i32, %arg1: i32) -> (i32, i32) {
    %c0_i32 = arith.constant 0 : i32
    %c0_i32_0 = arith.constant 0 : i32
    return %c0_i32, %arg1 : i32, i32
  }
  func.func @transform_3(%arg0: i32, %arg1: i32) -> (i32, i32, i32) {
    %c0_i32 = arith.constant 0 : i32
    %c0_i32_0 = arith.constant 0 : i32
    return %arg0, %c0_i32, %arg1 : i32, i32, i32
  }
}

</mosaic_0001>

<llo_original>
// kernel: _lambda_.1
$region0: #{_lambda_.1}
  #allocation0 [shape = 'u32[]', space=smem, size = 0x4, offset = 0x4, fixed_abs, tag = 'smem constant byte address 0x4 - core index']
  #allocation1 [shape = 'u32[72,128]{1,0:T(1,128)}', space=vmem, size = 0x9000, scoped, tag = 'internal scratch']
  %s0 = inlined_call_operand.vmem [shape: bf16[1,110,5], index: 0, kind: input, shape index: {}]
  %s1 = inlined_call_operand.vmem [shape: bf16[9,5,7], index: 1, kind: input, shape index: {}]
  %s2 = inlined_call_operand.vmem [shape: f32[1,7], index: 2, kind: input, shape index: {}]
  %s3 = inlined_call_operand.vmem [shape: bf16[1,80,7], index: 3, kind: output, shape index: {}]
  %s4 = sld [smem:[#allocation0]]
  $region22: #{_lambda_.1} parent=0
    _
  %s6 = ssub.s32 1, %s4
  %s7 = scalar_select 0, %s6, %s4
  // Predicated region
  $region2: #{_lambda_.1} parent=0 // pred_check
    _
  $region3: #{_lambda_.1} parent=0 // pred_check_branch
    %9 = sbr.rel (0) target = $region5
  $region4: #{_lambda_.1} parent=0 // pred_region
    _
  $region5: #{_lambda_.1} parent=0 // pred_fallthru
    _
  // Predicated region
  $region6: #{_lambda_.1} parent=0 // pred_check
    _
  $region7: #{_lambda_.1} parent=0 // pred_check_branch
    %11 = sbr.rel (0) target = $region9
  $region8: #{_lambda_.1} parent=0 // pred_region
    _
  $region9: #{_lambda_.1} parent=0 // pred_fallthru
    _
  // Predicated region
  $region10: #{_lambda_.1} parent=0 // pred_check
    _
  $region11: #{_lambda_.1} parent=0 // pred_check_branch
    %13 = sbr.rel (0) target = $region13
  $region12: #{_lambda_.1} parent=0 // pred_region
    _
  $region13: #{_lambda_.1} parent=0 // pred_fallthru
    _
  %v15 = vld [vmem:[%s0] sm:$0xf]
  %v16 = vld [vmem:[%s0 + $0x4] sm:$0xf]
  %v17 = vld [vmem:[%s0 + $0x8] sm:$0xf]
  %v18 = vld [vmem:[%s0 + $0xc] sm:$0xf]
  %v19 = vld [vmem:[%s0 + $0x10] sm:$0xf]
  %v20 = vld [vmem:[%s0 + $0x14] sm:$0xf]
  %v21 = vld [vmem:[%s0 + $0x18] sm:$0xf]
  %v22 = vld [vmem:[%s0 + $0x1c] sm:$0xf]
  %v23 = vld [vmem:[%s0 + $0x20] sm:$0xf]
  %v24 = vld [vmem:[%s0 + $0x24] sm:$0xf]
  %v25 = vld [vmem:[%s0 + $0x28] sm:$0xf]
  %v26 = vld [vmem:[%s0 + $0x2c] sm:$0xf]
  %v27 = vld [vmem:[%s0 + $0x30] sm:$0xf]
  %v28 = vld [vmem:[%s1] sm:$0x7]
  %s29 = scalar_lea.vmem %s1, 4
  %v30 = vld [vmem:[%s29] sm:$0x7]
  %v42 = vunpack.c.l.b16 %v15
  %v43 = vunpack.c.l.b16 %v16
  %v44 = vunpack.c.l.b16 %v17
  %v45 = vunpack.c.l.b16 %v18
  %v46 = vunpack.c.l.b16 %v19
  %v47 = vunpack.c.l.b16 %v20
  %v48 = vunpack.c.l.b16 %v21
  %v49 = vunpack.c.l.b16 %v22
  %v50 = vunpack.c.l.b16 %v23
  %v51 = vunpack.c.l.b16 %v24
  %v52 = vunpack.c.l.b16 %v25
  %v53 = vpack.c.b16 %v43, %v42
  %v54 = vpack.c.b16 %v45, %v44
  %v55 = vpack.c.b16 %v47, %v46
  %v56 = vpack.c.b16 %v49, %v48
  %v57 = vpack.c.b16 %v51, %v50
  %v58 = vpack.c.b16 %v52, %v52
  %vm59 = vsmask.f32 7424
  %v61 = vshrl.u32 %v53, 16
  %v63 = vshll.u32 %v53, 16
  %v65 = vrot.slane %v63, 1
  %v66 = vor.u32 %v61, %v65
  %v68 = vshll.u32 %v54, 16
  %v70 = vrot.slane %v68, 1
  %v71 = vsel %vm59, %v66, %v70
  %v72 = vshrl.u32 %v54, 16
  %v74 = vor.u32 %v72, %v70
  %v76 = vshll.u32 %v55, 16
  %v78 = vrot.slane %v76, 1
  %v79 = vsel %vm59, %v74, %v78
  %v80 = vshrl.u32 %v55, 16
  %v82 = vor.u32 %v80, %v78
  %v84 = vshll.u32 %v56, 16
  %v86 = vrot.slane %v84, 1
  %v87 = vsel %vm59, %v82, %v86
  %v88 = vshrl.u32 %v56, 16
  %v90 = vor.u32 %v88, %v86
  %v92 = vshll.u32 %v57, 16
  %v94 = vrot.slane %v92, 1
  %v95 = vsel %vm59, %v90, %v94
  %v96 = vshrl.u32 %v57, 16
  %v98 = vor.u32 %v96, %v94
  %v100 = vshll.u32 %v58, 16
  %v102 = vrot.slane %v100, 1
  %v103 = vsel %vm59, %v98, %v102
  %vm104 = vcmask 39936
  %v106 = vsel %vm104, %v71, 0
  %v109 = vsel %vm104, %v79, 0
  %v112 = vsel %vm104, %v87, 0
  %v115 = vsel %vm104, %v95, 0
  %v118 = vsel %vm104, %v103, 0
  %vm120 = vcmask 1041408
  %vm121 = vcmask 1042432
  %v122 = vsel %vm120, 4294967295, 65535
  %v123 = vsel %vm121, %v122, 0
  %v125 = vand.u32 %v30, %v123
  %127 = vmatpush.bf16.msra.mxu0 0
  %128 = vmatpush.bf16.msra.mxu0 0
  %129 = vmatpush.bf16.msra.mxu0 0
  %130 = vmatpush.bf16.msra.mxu0 0
  %131 = vmatpush.bf16.msra.mxu0 0
  %132 = vmatpush.bf16.msra.mxu0 0
  %133 = vmatpush.bf16.msra.mxu0 0
  %134 = vmatpush.bf16.msra.mxu0 %v125
  %135 = vmatmul.bf16.gmra.mxu0 %v106
  %v136 = vpop.f32.mrf.mxu0
  %v137 = vadd.f32 0.0, %v136
  %v138 = vpop.f32.mrf.mxu0
  %v139 = vadd.f32 0.0, %v138
  %140 = vmatmul.bf16.gmra.mxu0 %v109
  %v141 = vpop.f32.mrf.mxu0
  %v142 = vadd.f32 0.0, %v141
  %v143 = vpop.f32.mrf.mxu0
  %v144 = vadd.f32 0.0, %v143
  %145 = vmatmul.bf16.gmra.mxu0 %v112
  %v146 = vpop.f32.mrf.mxu0
  %v147 = vadd.f32 0.0, %v146
  %v148 = vpop.f32.mrf.mxu0
  %v149 = vadd.f32 0.0, %v148
  %150 = vmatmul.bf16.gmra.mxu0 %v115
  %v151 = vpop.f32.mrf.mxu0
  %v152 = vadd.f32 0.0, %v151
  %v153 = vpop.f32.mrf.mxu0
  %v154 = vadd.f32 0.0, %v153
  %155 = vmatmul.bf16.gmra.mxu0 %v118
  %v156 = vpop.f32.mrf.mxu0
  %v157 = vadd.f32 0.0, %v156
  %v158 = vpop.f32.mrf.mxu0
  %v159 = vadd.f32 0.0, %v158
  %160 = vdwg.mxu0
  %v161 = vsel %vm104, %v53, 0
  %v163 = vsel %vm104, %v54, 0
  %v165 = vsel %vm104, %v55, 0
  %v167 = vsel %vm104, %v56, 0
  %v169 = vsel %vm104, %v57, 0
  %v172 = vand.u32 %v28, %v123
  %174 = vmatpush.bf16.msra.mxu0 0
  %175 = vmatpush.bf16.msra.mxu0 0
  %176 = vmatpush.bf16.msra.mxu0 0
  %177 = vmatpush.bf16.msra.mxu0 0
  %178 = vmatpush.bf16.msra.mxu0 0
  %179 = vmatpush.bf16.msra.mxu0 0
  %180 = vmatpush.bf16.msra.mxu0 0
  %181 = vmatpush.bf16.msra.mxu0 %v172
  %182 = vmatmul.bf16.gmra.mxu0 %v161
  %v183 = vpop.f32.mrf.mxu0
  %v184 = vadd.f32 %v137, %v183
  %v185 = vpop.f32.mrf.mxu0
  %v186 = vadd.f32 %v139, %v185
  %187 = vmatmul.bf16.gmra.mxu0 %v163
  %v188 = vpop.f32.mrf.mxu0
  %v189 = vadd.f32 %v142, %v188
  %v190 = vpop.f32.mrf.mxu0
  %v191 = vadd.f32 %v144, %v190
  %192 = vmatmul.bf16.gmra.mxu0 %v165
  %v193 = vpop.f32.mrf.mxu0
  %v194 = vadd.f32 %v147, %v193
  %v195 = vpop.f32.mrf.mxu0
  %v196 = vadd.f32 %v149, %v195
  %197 = vmatmul.bf16.gmra.mxu0 %v167
  %v198 = vpop.f32.mrf.mxu0
  %v199 = vadd.f32 %v152, %v198
  %v200 = vpop.f32.mrf.mxu0
  %v201 = vadd.f32 %v154, %v200
  %202 = vmatmul.bf16.gmra.mxu0 %v169
  %v203 = vpop.f32.mrf.mxu0
  %v204 = vadd.f32 %v157, %v203
  %v205 = vpop.f32.mrf.mxu0
  %v206 = vadd.f32 %v159, %v205
  %207 = vdwg.mxu0
  %s208 = scalar_lea.vmem %s1, 8
  %v209 = vld [vmem:[%s208] sm:$0x7]
  %vm210 = vcmask 1046528
  %v211 = vrot.slane %v53, 1
  %v212 = vrot.slane %v54, 1
  %v213 = vsel %vm210, %v211, %v212
  %v214 = vrot.slane %v55, 1
  %v215 = vsel %vm210, %v212, %v214
  %v216 = vrot.slane %v56, 1
  %v217 = vsel %vm210, %v214, %v216
  %v218 = vrot.slane %v57, 1
  %v219 = vsel %vm210, %v216, %v218
  %v220 = vrot.slane %v58, 1
  %v221 = vsel %vm210, %v218, %v220
  %v223 = vsel %vm104, %v213, 0
  %v226 = vsel %vm104, %v215, 0
  %v229 = vsel %vm104, %v217, 0
  %v232 = vsel %vm104, %v219, 0
  %v235 = vsel %vm104, %v221, 0
  %v238 = vand.u32 %v209, %v123
  %240 = vmatpush.bf16.msra.mxu0 0
  %241 = vmatpush.bf16.msra.mxu0 0
  %242 = vmatpush.bf16.msra.mxu0 0
  %243 = vmatpush.bf16.msra.mxu0 0
  %244 = vmatpush.bf16.msra.mxu0 0
  %245 = vmatpush.bf16.msra.mxu0 0
  %246 = vmatpush.bf16.msra.mxu0 0
  %247 = vmatpush.bf16.msra.mxu0 %v238
  %248 = vmatmul.bf16.gmra.mxu0 %v223
  %v249 = vpop.f32.mrf.mxu0
  %v250 = vadd.f32 0.0, %v249
  %v251 = vpop.f32.mrf.mxu0
  %v252 = vadd.f32 0.0, %v251
  %253 = vmatmul.bf16.gmra.mxu0 %v226
  %v254 = vpop.f32.mrf.mxu0
  %v255 = vadd.f32 0.0, %v254
  %v256 = vpop.f32.mrf.mxu0
  %v257 = vadd.f32 0.0, %v256
  %258 = vmatmul.bf16.gmra.mxu0 %v229
  %v259 = vpop.f32.mrf.mxu0
  %v260 = vadd.f32 0.0, %v259
  %v261 = vpop.f32.mrf.mxu0
  %v262 = vadd.f32 0.0, %v261
  %263 = vmatmul.bf16.gmra.mxu0 %v232
  %v264 = vpop.f32.mrf.mxu0
  %v265 = vadd.f32 0.0, %v264
  %v266 = vpop.f32.mrf.mxu0
  %v267 = vadd.f32 0.0, %v266
  %268 = vmatmul.bf16.gmra.mxu0 %v235
  %v269 = vpop.f32.mrf.mxu0
  %v270 = vadd.f32 0.0, %v269
  %v271 = vpop.f32.mrf.mxu0
  %v272 = vadd.f32 0.0, %v271
  %273 = vdwg.mxu0
  %v274 = vadd.f32 %v184, %v250
  %v275 = vadd.f32 %v186, %v252
  %v276 = vadd.f32 %v189, %v255
  %v277 = vadd.f32 %v191, %v257
  %v278 = vadd.f32 %v194, %v260
  %v279 = vadd.f32 %v196, %v262
  %v280 = vadd.f32 %v199, %v265
  %v281 = vadd.f32 %v201, %v267
  %v282 = vadd.f32 %v204, %v270
  %v283 = vadd.f32 %v206, %v272
  %s284 = scalar_lea.vmem %s1, 12
  %v285 = vld [vmem:[%s284] sm:$0x7]
  %v287 = vunpack.c.l.b16 %v26
  %v288 = vpack.c.b16 %v44, %v43
  %v289 = vpack.c.b16 %v46, %v45
  %v290 = vpack.c.b16 %v48, %v47
  %v291 = vpack.c.b16 %v50, %v49
  %v292 = vpack.c.b16 %v52, %v51
  %v293 = vpack.c.b16 %v287, %v287
  %v294 = vrot.slane %v288, 1
  %v295 = vrot.slane %v289, 1
  %v296 = vsel %vm210, %v294, %v295
  %v297 = vrot.slane %v290, 1
  %v298 = vsel %vm210, %v295, %v297
  %v299 = vrot.slane %v291, 1
  %v300 = vsel %vm210, %v297, %v299
  %v301 = vrot.slane %v292, 1
  %v302 = vsel %vm210, %v299, %v301
  %v303 = vrot.slane %v293, 1
  %v304 = vsel %vm210, %v301, %v303
  %v306 = vsel %vm104, %v296, 0
  %v309 = vsel %vm104, %v298, 0
  %v312 = vsel %vm104, %v300, 0
  %v315 = vsel %vm104, %v302, 0
  %v318 = vsel %vm104, %v304, 0
  %v321 = vand.u32 %v285, %v123
  %323 = vmatpush.bf16.msra.mxu0 0
  %324 = vmatpush.bf16.msra.mxu0 0
  %325 = vmatpush.bf16.msra.mxu0 0
  %326 = vmatpush.bf16.msra.mxu0 0
  %327 = vmatpush.bf16.msra.mxu0 0
  %328 = vmatpush.bf16.msra.mxu0 0
  %329 = vmatpush.bf16.msra.mxu0 0
  %330 = vmatpush.bf16.msra.mxu0 %v321
  %331 = vmatmul.bf16.gmra.mxu0 %v306
  %v332 = vpop.f32.mrf.mxu0
  %v333 = vadd.f32 0.0, %v332
  %v334 = vpop.f32.mrf.mxu0
  %v335 = vadd.f32 0.0, %v334
  %336 = vmatmul.bf16.gmra.mxu0 %v309
  %v337 = vpop.f32.mrf.mxu0
  %v338 = vadd.f32 0.0, %v337
  %v339 = vpop.f32.mrf.mxu0
  %v340 = vadd.f32 0.0, %v339
  %341 = vmatmul.bf16.gmra.mxu0 %v312
  %v342 = vpop.f32.mrf.mxu0
  %v343 = vadd.f32 0.0, %v342
  %v344 = vpop.f32.mrf.mxu0
  %v345 = vadd.f32 0.0, %v344
  %346 = vmatmul.bf16.gmra.mxu0 %v315
  %v347 = vpop.f32.mrf.mxu0
  %v348 = vadd.f32 0.0, %v347
  %v349 = vpop.f32.mrf.mxu0
  %v350 = vadd.f32 0.0, %v349
  %351 = vmatmul.bf16.gmra.mxu0 %v318
  %v352 = vpop.f32.mrf.mxu0
  %v353 = vadd.f32 0.0, %v352
  %v354 = vpop.f32.mrf.mxu0
  %v355 = vadd.f32 0.0, %v354
  %356 = vdwg.mxu0
  %v357 = vadd.f32 %v274, %v333
  %v358 = vadd.f32 %v275, %v335
  %v359 = vadd.f32 %v276, %v338
  %v360 = vadd.f32 %v277, %v340
  %v361 = vadd.f32 %v278, %v343
  %v362 = vadd.f32 %v279, %v345
  %v363 = vadd.f32 %v280, %v348
  %v364 = vadd.f32 %v281, %v350
  %v365 = vadd.f32 %v282, %v353
  %v366 = vadd.f32 %v283, %v355
  %s367 = scalar_lea.vmem %s1, 16
  %v368 = vld [vmem:[%s367] sm:$0x7]
  %vm369 = vsmask.f32 6400
  %v371 = vshrl.u32 %v288, 16
  %v373 = vrot.slane %v371, 1
  %v374 = vshll.u32 %v288, 16
  %v376 = vrot.slane %v374, 2
  %v377 = vor.u32 %v373, %v376
  %v379 = vshrl.u32 %v289, 16
  %v381 = vrot.slane %v379, 1
  %v382 = vshll.u32 %v289, 16
  %v384 = vrot.slane %v382, 2
  %v385 = vor.u32 %v381, %v384
  %v386 = vsel %vm369, %v377, %v385
  %v388 = vshrl.u32 %v290, 16
  %v390 = vrot.slane %v388, 1
  %v391 = vshll.u32 %v290, 16
  %v393 = vrot.slane %v391, 2
  %v394 = vor.u32 %v390, %v393
  %v395 = vsel %vm369, %v385, %v394
  %v397 = vshrl.u32 %v291, 16
  %v399 = vrot.slane %v397, 1
  %v400 = vshll.u32 %v291, 16
  %v402 = vrot.slane %v400, 2
  %v403 = vor.u32 %v399, %v402
  %v404 = vsel %vm369, %v394, %v403
  %v406 = vshrl.u32 %v292, 16
  %v408 = vrot.slane %v406, 1
  %v409 = vshll.u32 %v292, 16
  %v411 = vrot.slane %v409, 2
  %v412 = vor.u32 %v408, %v411
  %v413 = vsel %vm369, %v403, %v412
  %v415 = vshrl.u32 %v293, 16
  %v417 = vrot.slane %v415, 1
  %v418 = vshll.u32 %v293, 16
  %v420 = vrot.slane %v418, 2
  %v421 = vor.u32 %v417, %v420
  %v422 = vsel %vm369, %v412, %v421
  %v424 = vsel %vm104, %v386, 0
  %v427 = vsel %vm104, %v395, 0
  %v430 = vsel %vm104, %v404, 0
  %v433 = vsel %vm104, %v413, 0
  %v436 = vsel %vm104, %v422, 0
  %v439 = vand.u32 %v368, %v123
  %441 = vmatpush.bf16.msra.mxu0 0
  %442 = vmatpush.bf16.msra.mxu0 0
  %443 = vmatpush.bf16.msra.mxu0 0
  %444 = vmatpush.bf16.msra.mxu0 0
  %445 = vmatpush.bf16.msra.mxu0 0
  %446 = vmatpush.bf16.msra.mxu0 0
  %447 = vmatpush.bf16.msra.mxu0 0
  %448 = vmatpush.bf16.msra.mxu0 %v439
  %449 = vmatmul.bf16.gmra.mxu0 %v424
  %v450 = vpop.f32.mrf.mxu0
  %v451 = vadd.f32 0.0, %v450
  %v452 = vpop.f32.mrf.mxu0
  %v453 = vadd.f32 0.0, %v452
  %454 = vmatmul.bf16.gmra.mxu0 %v427
  %v455 = vpop.f32.mrf.mxu0
  %v456 = vadd.f32 0.0, %v455
  %v457 = vpop.f32.mrf.mxu0
  %v458 = vadd.f32 0.0, %v457
  %459 = vmatmul.bf16.gmra.mxu0 %v430
  %v460 = vpop.f32.mrf.mxu0
  %v461 = vadd.f32 0.0, %v460
  %v462 = vpop.f32.mrf.mxu0
  %v463 = vadd.f32 0.0, %v462
  %464 = vmatmul.bf16.gmra.mxu0 %v433
  %v465 = vpop.f32.mrf.mxu0
  %v466 = vadd.f32 0.0, %v465
  %v467 = vpop.f32.mrf.mxu0
  %v468 = vadd.f32 0.0, %v467
  %469 = vmatmul.bf16.gmra.mxu0 %v436
  %v470 = vpop.f32.mrf.mxu0
  %v471 = vadd.f32 0.0, %v470
  %v472 = vpop.f32.mrf.mxu0
  %v473 = vadd.f32 0.0, %v472
  %474 = vdwg.mxu0
  %v475 = vadd.f32 %v357, %v451
  %v476 = vadd.f32 %v358, %v453
  %v477 = vadd.f32 %v359, %v456
  %v478 = vadd.f32 %v360, %v458
  %v479 = vadd.f32 %v361, %v461
  %v480 = vadd.f32 %v362, %v463
  %v481 = vadd.f32 %v363, %v466
  %v482 = vadd.f32 %v364, %v468
  %v483 = vadd.f32 %v365, %v471
  %v484 = vadd.f32 %v366, %v473
  %s485 = scalar_lea.vmem %s1, 20
  %v486 = vld [vmem:[%s485] sm:$0x7]
  %vm487 = vcmask 1045504
  %v488 = vrot.slane %v288, 2
  %v489 = vrot.slane %v289, 2
  %v490 = vsel %vm487, %v488, %v489
  %v491 = vrot.slane %v290, 2
  %v492 = vsel %vm487, %v489, %v491
  %v493 = vrot.slane %v291, 2
  %v494 = vsel %vm487, %v491, %v493
  %v495 = vrot.slane %v292, 2
  %v496 = vsel %vm487, %v493, %v495
  %v497 = vrot.slane %v293, 2
  %v498 = vsel %vm487, %v495, %v497
  %v500 = vsel %vm104, %v490, 0
  %v503 = vsel %vm104, %v492, 0
  %v506 = vsel %vm104, %v494, 0
  %v509 = vsel %vm104, %v496, 0
  %v512 = vsel %vm104, %v498, 0
  %v515 = vand.u32 %v486, %v123
  %517 = vmatpush.bf16.msra.mxu0 0
  %518 = vmatpush.bf16.msra.mxu0 0
  %519 = vmatpush.bf16.msra.mxu0 0
  %520 = vmatpush.bf16.msra.mxu0 0
  %521 = vmatpush.bf16.msra.mxu0 0
  %522 = vmatpush.bf16.msra.mxu0 0
  %523 = vmatpush.bf16.msra.mxu0 0
  %524 = vmatpush.bf16.msra.mxu0 %v515
  %525 = vmatmul.bf16.gmra.mxu0 %v500
  %v526 = vpop.f32.mrf.mxu0
  %v527 = vadd.f32 0.0, %v526
  %v528 = vpop.f32.mrf.mxu0
  %v529 = vadd.f32 0.0, %v528
  %530 = vmatmul.bf16.gmra.mxu0 %v503
  %v531 = vpop.f32.mrf.mxu0
  %v532 = vadd.f32 0.0, %v531
  %v533 = vpop.f32.mrf.mxu0
  %v534 = vadd.f32 0.0, %v533
  %535 = vmatmul.bf16.gmra.mxu0 %v506
  %v536 = vpop.f32.mrf.mxu0
  %v537 = vadd.f32 0.0, %v536
  %v538 = vpop.f32.mrf.mxu0
  %v539 = vadd.f32 0.0, %v538
  %540 = vmatmul.bf16.gmra.mxu0 %v509
  %v541 = vpop.f32.mrf.mxu0
  %v542 = vadd.f32 0.0, %v541
  %v543 = vpop.f32.mrf.mxu0
  %v544 = vadd.f32 0.0, %v543
  %545 = vmatmul.bf16.gmra.mxu0 %v512
  %v546 = vpop.f32.mrf.mxu0
  %v547 = vadd.f32 0.0, %v546
  %v548 = vpop.f32.mrf.mxu0
  %v549 = vadd.f32 0.0, %v548
  %550 = vdwg.mxu0
  %v551 = vadd.f32 %v475, %v527
  %v552 = vadd.f32 %v476, %v529
  %v553 = vadd.f32 %v477, %v532
  %v554 = vadd.f32 %v478, %v534
  %v555 = vadd.f32 %v479, %v537
  %v556 = vadd.f32 %v480, %v539
  %v557 = vadd.f32 %v481, %v542
  %v558 = vadd.f32 %v482, %v544
  %v559 = vadd.f32 %v483, %v547
  %v560 = vadd.f32 %v484, %v549
  %s561 = scalar_lea.vmem %s1, 24
  %v562 = vld [vmem:[%s561] sm:$0x7]
  %v564 = vunpack.c.l.b16 %v27
  %v565 = vpack.c.b16 %v287, %v52
  %v566 = vpack.c.b16 %v564, %v564
  %v567 = vrot.slane %v54, 2
  %v568 = vrot.slane %v55, 2
  %v569 = vsel %vm487, %v567, %v568
  %v570 = vrot.slane %v56, 2
  %v571 = vsel %vm487, %v568, %v570
  %v572 = vrot.slane %v57, 2
  %v573 = vsel %vm487, %v570, %v572
  %v574 = vrot.slane %v565, 2
  %v575 = vsel %vm487, %v572, %v574
  %v576 = vrot.slane %v566, 2
  %v577 = vsel %vm487, %v574, %v576
  %v579 = vsel %vm104, %v569, 0
  %v582 = vsel %vm104, %v571, 0
  %v585 = vsel %vm104, %v573, 0
  %v588 = vsel %vm104, %v575, 0
  %v591 = vsel %vm104, %v577, 0
  %v594 = vand.u32 %v562, %v123
  %596 = vmatpush.bf16.msra.mxu0 0
  %597 = vmatpush.bf16.msra.mxu0 0
  %598 = vmatpush.bf16.msra.mxu0 0
  %599 = vmatpush.bf16.msra.mxu0 0
  %600 = vmatpush.bf16.msra.mxu0 0
  %601 = vmatpush.bf16.msra.mxu0 0
  %602 = vmatpush.bf16.msra.mxu0 0
  %603 = vmatpush.bf16.msra.mxu0 %v594
  %604 = vmatmul.bf16.gmra.mxu0 %v579
  %v605 = vpop.f32.mrf.mxu0
  %v606 = vadd.f32 0.0, %v605
  %v607 = vpop.f32.mrf.mxu0
  %v608 = vadd.f32 0.0, %v607
  %609 = vmatmul.bf16.gmra.mxu0 %v582
  %v610 = vpop.f32.mrf.mxu0
  %v611 = vadd.f32 0.0, %v610
  %v612 = vpop.f32.mrf.mxu0
  %v613 = vadd.f32 0.0, %v612
  %614 = vmatmul.bf16.gmra.mxu0 %v585
  %v615 = vpop.f32.mrf.mxu0
  %v616 = vadd.f32 0.0, %v615
  %v617 = vpop.f32.mrf.mxu0
  %v618 = vadd.f32 0.0, %v617
  %619 = vmatmul.bf16.gmra.mxu0 %v588
  %v620 = vpop.f32.mrf.mxu0
  %v621 = vadd.f32 0.0, %v620
  %v622 = vpop.f32.mrf.mxu0
  %v623 = vadd.f32 0.0, %v622
  %624 = vmatmul.bf16.gmra.mxu0 %v591
  %v625 = vpop.f32.mrf.mxu0
  %v626 = vadd.f32 0.0, %v625
  %v627 = vpop.f32.mrf.mxu0
  %v628 = vadd.f32 0.0, %v627
  %629 = vdwg.mxu0
  %v630 = vadd.f32 %v551, %v606
  %v631 = vadd.f32 %v552, %v608
  %v632 = vadd.f32 %v553, %v611
  %v633 = vadd.f32 %v554, %v613
  %v634 = vadd.f32 %v555, %v616
  %v635 = vadd.f32 %v556, %v618
  %v636 = vadd.f32 %v557, %v621
  %v637 = vadd.f32 %v558, %v623
  %v638 = vadd.f32 %v559, %v626
  %v639 = vadd.f32 %v560, %v628
  %s640 = scalar_lea.vmem %s1, 28
  %v641 = vld [vmem:[%s640] sm:$0x7]
  %vm642 = vsmask.f32 5376
  %v643 = vrot.slane %v72, 2
  %v644 = vrot.slane %v68, 3
  %v645 = vor.u32 %v643, %v644
  %v646 = vrot.slane %v80, 2
  %v647 = vrot.slane %v76, 3
  %v648 = vor.u32 %v646, %v647
  %v649 = vsel %vm642, %v645, %v648
  %v650 = vrot.slane %v88, 2
  %v651 = vrot.slane %v84, 3
  %v652 = vor.u32 %v650, %v651
  %v653 = vsel %vm642, %v648, %v652
  %v654 = vrot.slane %v96, 2
  %v655 = vrot.slane %v92, 3
  %v656 = vor.u32 %v654, %v655
  %v657 = vsel %vm642, %v652, %v656
  %v659 = vshrl.u32 %v565, 16
  %v661 = vrot.slane %v659, 2
  %v662 = vshll.u32 %v565, 16
  %v664 = vrot.slane %v662, 3
  %v665 = vor.u32 %v661, %v664
  %v666 = vsel %vm642, %v656, %v665
  %v668 = vshrl.u32 %v566, 16
  %v670 = vrot.slane %v668, 2
  %v671 = vshll.u32 %v566, 16
  %v673 = vrot.slane %v671, 3
  %v674 = vor.u32 %v670, %v673
  %v675 = vsel %vm642, %v665, %v674
  %v677 = vsel %vm104, %v649, 0
  %v680 = vsel %vm104, %v653, 0
  %v683 = vsel %vm104, %v657, 0
  %v686 = vsel %vm104, %v666, 0
  %v689 = vsel %vm104, %v675, 0
  %v692 = vand.u32 %v641, %v123
  %694 = vmatpush.bf16.msra.mxu0 0
  %695 = vmatpush.bf16.msra.mxu0 0
  %696 = vmatpush.bf16.msra.mxu0 0
  %697 = vmatpush.bf16.msra.mxu0 0
  %698 = vmatpush.bf16.msra.mxu0 0
  %699 = vmatpush.bf16.msra.mxu0 0
  %700 = vmatpush.bf16.msra.mxu0 0
  %701 = vmatpush.bf16.msra.mxu0 %v692
  %702 = vmatmul.bf16.gmra.mxu0 %v677
  %v703 = vpop.f32.mrf.mxu0
  %v704 = vadd.f32 0.0, %v703
  %v705 = vpop.f32.mrf.mxu0
  %v706 = vadd.f32 0.0, %v705
  %707 = vmatmul.bf16.gmra.mxu0 %v680
  %v708 = vpop.f32.mrf.mxu0
  %v709 = vadd.f32 0.0, %v708
  %v710 = vpop.f32.mrf.mxu0
  %v711 = vadd.f32 0.0, %v710
  %712 = vmatmul.bf16.gmra.mxu0 %v683
  %v713 = vpop.f32.mrf.mxu0
  %v714 = vadd.f32 0.0, %v713
  %v715 = vpop.f32.mrf.mxu0
  %v716 = vadd.f32 0.0, %v715
  %717 = vmatmul.bf16.gmra.mxu0 %v686
  %v718 = vpop.f32.mrf.mxu0
  %v719 = vadd.f32 0.0, %v718
  %v720 = vpop.f32.mrf.mxu0
  %v721 = vadd.f32 0.0, %v720
  %722 = vmatmul.bf16.gmra.mxu0 %v689
  %v723 = vpop.f32.mrf.mxu0
  %v724 = vadd.f32 0.0, %v723
  %v725 = vpop.f32.mrf.mxu0
  %v726 = vadd.f32 0.0, %v725
  %727 = vdwg.mxu0
  %v728 = vadd.f32 %v630, %v704
  %v729 = vadd.f32 %v631, %v706
  %v730 = vadd.f32 %v632, %v709
  %v731 = vadd.f32 %v633, %v711
  %v732 = vadd.f32 %v634, %v714
  %v733 = vadd.f32 %v635, %v716
  %v734 = vadd.f32 %v636, %v719
  %v735 = vadd.f32 %v637, %v721
  %v736 = vadd.f32 %v638, %v724
  %v737 = vadd.f32 %v639, %v726
  %s738 = scalar_lea.vmem %s1, 32
  %v739 = vld [vmem:[%s738] sm:$0x7]
  %vm740 = vcmask 1044480
  %v741 = vrot.slane %v54, 3
  %v742 = vrot.slane %v55, 3
  %v743 = vsel %vm740, %v741, %v742
  %v744 = vrot.slane %v56, 3
  %v745 = vsel %vm740, %v742, %v744
  %v746 = vrot.slane %v57, 3
  %v747 = vsel %vm740, %v744, %v746
  %v748 = vrot.slane %v565, 3
  %v749 = vsel %vm740, %v746, %v748
  %v750 = vrot.slane %v566, 3
  %v751 = vsel %vm740, %v748, %v750
  %v753 = vsel %vm104, %v743, 0
  %v756 = vsel %vm104, %v745, 0
  %v759 = vsel %vm104, %v747, 0
  %v762 = vsel %vm104, %v749, 0
  %v765 = vsel %vm104, %v751, 0
  %v768 = vand.u32 %v739, %v123
  %770 = vmatpush.bf16.msra.mxu0 0
  %771 = vmatpush.bf16.msra.mxu0 0
  %772 = vmatpush.bf16.msra.mxu0 0
  %773 = vmatpush.bf16.msra.mxu0 0
  %774 = vmatpush.bf16.msra.mxu0 0
  %775 = vmatpush.bf16.msra.mxu0 0
  %776 = vmatpush.bf16.msra.mxu0 0
  %777 = vmatpush.bf16.msra.mxu0 %v768
  %778 = vmatmul.bf16.gmra.mxu0 %v753
  %v779 = vpop.f32.mrf.mxu0
  %v780 = vadd.f32 0.0, %v779
  %v781 = vpop.f32.mrf.mxu0
  %v782 = vadd.f32 0.0, %v781
  %783 = vmatmul.bf16.gmra.mxu0 %v756
  %v784 = vpop.f32.mrf.mxu0
  %v785 = vadd.f32 0.0, %v784
  %v786 = vpop.f32.mrf.mxu0
  %v787 = vadd.f32 0.0, %v786
  %788 = vmatmul.bf16.gmra.mxu0 %v759
  %v789 = vpop.f32.mrf.mxu0
  %v790 = vadd.f32 0.0, %v789
  %v791 = vpop.f32.mrf.mxu0
  %v792 = vadd.f32 0.0, %v791
  %793 = vmatmul.bf16.gmra.mxu0 %v762
  %v794 = vpop.f32.mrf.mxu0
  %v795 = vadd.f32 0.0, %v794
  %v796 = vpop.f32.mrf.mxu0
  %v797 = vadd.f32 0.0, %v796
  %798 = vmatmul.bf16.gmra.mxu0 %v765
  %v799 = vpop.f32.mrf.mxu0
  %v800 = vadd.f32 0.0, %v799
  %v801 = vpop.f32.mrf.mxu0
  %v802 = vadd.f32 0.0, %v801
  %803 = vdwg.mxu0
  %v804 = vadd.f32 %v728, %v780
  %v805 = vadd.f32 %v729, %v782
  %v806 = vadd.f32 %v730, %v785
  %v807 = vadd.f32 %v731, %v787
  %v808 = vadd.f32 %v732, %v790
  %v809 = vadd.f32 %v733, %v792
  %v810 = vadd.f32 %v734, %v795
  %v811 = vadd.f32 %v735, %v797
  %v812 = vadd.f32 %v736, %v800
  %v813 = vadd.f32 %v737, %v802
  %v814 = vld [vmem:[%s2] sm:$0x1]
  %v816 = vperm.slane %v814, 0
  %v818 = vadd.f32 %v804, %v816
  %v819 = vadd.f32 %v805, %v816
  %v820 = vadd.f32 %v806, %v816
  %v821 = vadd.f32 %v807, %v816
  %v822 = vadd.f32 %v808, %v816
  %v823 = vadd.f32 %v809, %v816
  %v824 = vadd.f32 %v810, %v816
  %v825 = vadd.f32 %v811, %v816
  %v826 = vadd.f32 %v812, %v816
  %v827 = vadd.f32 %v813, %v816
  %v828 = vpack.c.bf16 %v818, %v818
  %v829 = vpack.c.bf16 %v819, %v819
  %v830 = vpack.c.bf16 %v820, %v820
  %v831 = vpack.c.bf16 %v821, %v821
  %v832 = vpack.c.bf16 %v822, %v822
  %v833 = vpack.c.bf16 %v823, %v823
  %v834 = vpack.c.bf16 %v824, %v824
  %v835 = vpack.c.bf16 %v825, %v825
  %v836 = vpack.c.bf16 %v826, %v826
  %v837 = vpack.c.bf16 %v827, %v827
  %vm838 = vcmask 52224
  %839 = vst.msk [vmem:[%s3] sm:$0xf] %vm838, %v828
  %840 = vst.msk [vmem:[%s3 + $0x4] sm:$0xf] %vm838, %v829
  %841 = vst.msk [vmem:[%s3 + $0x8] sm:$0xf] %vm838, %v830
  %842 = vst.msk [vmem:[%s3 + $0xc] sm:$0xf] %vm838, %v831
  %843 = vst.msk [vmem:[%s3 + $0x10] sm:$0xf] %vm838, %v832
  %844 = vst.msk [vmem:[%s3 + $0x14] sm:$0xf] %vm838, %v833
  %845 = vst.msk [vmem:[%s3 + $0x18] sm:$0xf] %vm838, %v834
  %846 = vst.msk [vmem:[%s3 + $0x1c] sm:$0xf] %vm838, %v835
  %847 = vst.msk [vmem:[%s3 + $0x20] sm:$0xf] %vm838, %v836
  %848 = vst.msk [vmem:[%s3 + $0x24] sm:$0xf] %vm838, %v837
  // Predicated region
  $region14: #{_lambda_.1} parent=0 // pred_check
    _
  $region15: #{_lambda_.1} parent=0 // pred_check_branch
    %850 = sbr.rel (0) target = $region17
  $region16: #{_lambda_.1} parent=0 // pred_region
    _
  $region17: #{_lambda_.1} parent=0 // pred_fallthru
    _
  // Predicated region
  $region18: #{_lambda_.1} parent=0 // pred_check
    _
  $region19: #{_lambda_.1} parent=0 // pred_check_branch
    %852 = sbr.rel (0) target = $region21
  $region20: #{_lambda_.1} parent=0 // pred_region
    _
  $region21: #{_lambda_.1} parent=0 // pred_fallthru
    _

</llo_original>
